<compile_context>
chip_gen: v5e
topology: v5e:2x2
jax: 0.10.0
libtpu: 0.0.40
codegen_flags: <defaults>
</compile_context>

<pallas_src>
import functools

import jax
import jax.numpy as jnp
from jax.experimental import pallas as pl
from jax.experimental.pallas import tpu as pltpu


def _projector_kernel(x_ref, w_ref, b_ref, o_ref):
    # x_ref: (tm, K)  activation tile   (compute dtype)
    # w_ref: (K, tn)  weight slab       (compute dtype, pre-transposed)
    # b_ref: (1, tn)  bias slab         (float32)
    # o_ref: (tm, tn) output tile       (output dtype)
    acc = jnp.dot(x_ref[...], w_ref[...], preferred_element_type=jnp.float32)
    o_ref[...] = (acc + b_ref[...]).astype(o_ref.dtype)


def prepare_projector_params(weight, bias, compute_dtype=jnp.bfloat16):
    """One-time (model-load) layout/dtype prep, OUTSIDE the per-call path.

    weight: (projection_dim, hidden_size) torch nn.Linear weight -> (K, N) compute_dtype
    bias:   (projection_dim,)                                    -> (1, N) float32
    """
    w_t = jnp.asarray(weight).T.astype(compute_dtype)          # (K, N)
    b2d = jnp.asarray(bias).astype(jnp.float32).reshape(1, -1)  # (1, N)
    return w_t, b2d


@functools.partial(jax.jit,
                   static_argnames=("block_m", "block_n", "x_resident_bytes"))
def spatialvla_multimodal_projector(image_features, weight_t, bias2d, *,
                                    block_m=256, block_n=None,
                                    x_resident_bytes=8 * 1024 * 1024):
    """y = image_features @ weight_t + bias  (nn.Linear semantics).

    image_features: (B, S, K)
    weight_t:       (K, N) pre-transposed weight in the compute dtype
                    (see prepare_projector_params)
    bias2d:         (1, N) float32
    returns:        (B, S, N) in image_features.dtype
    """
    B, S, K = image_features.shape
    Kw, N = weight_t.shape
    assert Kw == K, "weight_t must be (hidden_size, projection_dim)"
    assert bias2d.shape == (1, N)

    out_dtype = image_features.dtype
    compute_dtype = weight_t.dtype          # compute dtype fixed at model load
    c = jnp.dtype(compute_dtype).itemsize
    o = jnp.dtype(out_dtype).itemsize

    if block_n is None:
        block_n = 2048 if c < 4 else 1024   # bigger slabs in bf16 (half the bytes)

    M = B * S
    x2d = image_features.reshape(M, K).astype(compute_dtype)

    # N tiling: lane-dense 128-multiples when N is aligned; otherwise a single
    # full-width slab (small / unusual N).  No N padding is ever materialized —
    # a ragged last block is just a masked edge store.
    n_aligned = (N % 128 == 0)
    tn = min(block_n, N) if n_aligned else N

    def tile_bytes(tm_, tn_):
        # Double-buffered x / weight / output tiles plus the f32 bias slabs.
        return 2 * (tm_ * K * c + K * tn_ * c + tm_ * tn_ * o) + 2 * tn_ * 4

    budget = 36 * 1024 * 1024   # stay well inside v7x's 64 MiB VMEM / TensorCore

    x_resident = (2 * M * K * c) <= x_resident_bytes

    if x_resident:
        # --- x-resident fast path: 1-D grid over N, whole activation in VMEM ---
        tm = M
        while n_aligned and tn > 128 and tile_bytes(tm, tn) > budget:
            tn //= 2
        n_n = pl.cdiv(N, tn)
        grid = (n_n,)
        in_specs = [
            pl.BlockSpec((M, K), lambda j: (0, 0)),    # constant -> DMA'd once
            pl.BlockSpec((K, tn), lambda j: (0, j)),   # weight slabs stream over N
            pl.BlockSpec((1, tn), lambda j: (0, j)),   # bias slab
        ]
        out_specs = pl.BlockSpec((M, tn), lambda j: (0, j))
        dims = ("parallel",)                 # megacore splits disjoint weight slabs
        out_rows = M
        pad_m = 0
        x_passes = 1
    else:
        # --- streamed fallback for large M: weight-slab outer, M inner ---------
        pad_m = (-M) % 8                     # sublane alignment for the M tiles
        M_pad = M + pad_m
        if pad_m:
            x2d = jnp.pad(x2d, ((0, pad_m), (0, 0)))
        tm = min(block_m, M_pad)
        while n_aligned and tn > 128 and tile_bytes(tm, tn) > budget:
            tn //= 2
        n_n = pl.cdiv(N, tn)
        n_m = pl.cdiv(M_pad, tm)
        grid = (n_n, n_m)                    # N outer (slow), M inner (fast)
        in_specs = [
            pl.BlockSpec((tm, K), lambda j, i: (i, 0)),   # x streams over M
            pl.BlockSpec((K, tn), lambda j, i: (0, j)),   # constant over inner i
            pl.BlockSpec((1, tn), lambda j, i: (0, j)),   # bias slab
        ]
        out_specs = pl.BlockSpec((tm, tn), lambda j, i: (i, j))
        # Pin megacore sharding to the weight-slab (N) axis so each TensorCore
        # owns disjoint slabs (weight fetched once chip-wide); only when there is
        # a single slab do we let the M axis split instead.
        dims = ("parallel", "arbitrary") if n_n >= 2 else ("parallel", "parallel")
        out_rows = M_pad
        x_passes = n_n

    vmem_limit = int(min(40 * 1024 * 1024,
                         max(16 * 1024 * 1024,
                             tile_bytes(tm, tn) + 4 * 1024 * 1024)))

    cost = pl.CostEstimate(
        flops=2 * M * K * N,
        transcendentals=0,
        bytes_accessed=int(x_passes * M * K * c + K * N * c + M * N * o + N * 4),
    )

    out2d = pl.pallas_call(
        _projector_kernel,
        out_shape=jax.ShapeDtypeStruct((out_rows, N), out_dtype),
        grid_spec=pltpu.PrefetchScalarGridSpec(
            num_scalar_prefetch=0,
            grid=grid,
            in_specs=in_specs,
            out_specs=out_specs,
        ),
        compiler_params=pltpu.CompilerParams(
            dimension_semantics=dims,
            vmem_limit_bytes=vmem_limit,
        ),
        cost_estimate=cost,
    )(x2d, weight_t, bias2d)

    if pad_m:
        out2d = out2d[:M]
    return out2d.reshape(B, S, N)


if __name__ == "__main__":
    # Small synthetic config:
    #   vision_config.hidden_size    = 32
    #   vision_config.projection_dim = 64
    batch, seq, hidden, proj_dim = 2, 8, 32, 64

    key = jax.random.PRNGKey(0)
    k_x, k_w, k_b = jax.random.split(key, 3)

    image_features = jax.random.normal(k_x, (batch, seq, hidden), dtype=jnp.float32)
    weight = (jax.random.normal(k_w, (proj_dim, hidden), dtype=jnp.float32)
              * (1.0 / jnp.sqrt(hidden)))
    bias = jax.random.normal(k_b, (proj_dim,), dtype=jnp.float32) * 0.01

    # Reference: plain JAX, same math as torch nn.Linear.
    ref = jnp.einsum("bsk,nk->bsn", image_features, weight) + bias

    # ---- exact f32 path (x-resident 1-D grid) -------------------------------
    w_f32, b_f32 = prepare_projector_params(weight, bias, compute_dtype=jnp.float32)
    w_f32, b_f32 = jax.block_until_ready((w_f32, b_f32))
    out = spatialvla_multimodal_projector(image_features, w_f32, b_f32)
    out = jax.block_until_ready(out)
    assert out.shape == (batch, seq, proj_dim)
    assert jnp.allclose(out, ref, atol=1e-5, rtol=1e-5), "f32 mismatch vs reference"

    # ---- default inference path: bf16 operands, f32 accumulation ------------
    w_bf16, b_bf16 = prepare_projector_params(weight, bias)   # bf16 default
    w_bf16, b_bf16 = jax.block_until_ready((w_bf16, b_bf16))
    out_bf16 = spatialvla_multimodal_projector(image_features, w_bf16, b_bf16)
    out_bf16 = jax.block_until_ready(out_bf16)
    assert out_bf16.shape == (batch, seq, proj_dim)
    assert jnp.allclose(out_bf16, ref, atol=5e-2, rtol=5e-2), "bf16 mismatch vs reference"

    # ---- force the streamed (2-D grid) fallback for coverage ----------------
    out_stream = spatialvla_multimodal_projector(
        image_features, w_f32, b_f32, x_resident_bytes=0)
    out_stream = jax.block_until_ready(out_stream)
    assert jnp.allclose(out_stream, ref, atol=1e-5, rtol=1e-5), "streamed-path mismatch"

    print("KERNEL_OK")
</pallas_src>

<mosaic_0001>
module attributes {stable_mosaic.version = 11 : i64} {
  func.func @_projector_kernel(%arg0: i32, %arg1: memref<16x32xf32, #tpu.memory_space<vmem>>, %arg2: memref<32x64xf32, #tpu.memory_space<vmem>>, %arg3: memref<1x64xf32, #tpu.memory_space<vmem>>, %arg4: memref<16x64xf32, #tpu.memory_space<vmem>>) attributes {dimension_semantics = [#tpu.dimension_semantics<parallel>], iteration_bounds = array<i64: 1>, scalar_prefetch = 0 : i64, scratch_operands = 0 : i64, tpu.core_type = #tpu.core_type<tc>, window_params = [{pipeline_mode = #tpu.pipeline_mode<synchronous>, transform_indices = @transform_0, window_bounds = array<i64: 16, 32>}, {transform_indices = @transform_1, window_bounds = array<i64: 32, 64>}, {transform_indices = @transform_2, window_bounds = array<i64: 1, 64>}, {transform_indices = @transform_3, window_bounds = array<i64: 16, 64>}]} {
    %c0 = arith.constant 0 : index
    %c0_0 = arith.constant 0 : index
    %0 = vector.load %arg1[%c0, %c0_0] : memref<16x32xf32, #tpu.memory_space<vmem>>, vector<16x32xf32>
    %c0_1 = arith.constant 0 : index
    %c0_2 = arith.constant 0 : index
    %1 = vector.load %arg2[%c0_1, %c0_2] : memref<32x64xf32, #tpu.memory_space<vmem>>, vector<32x64xf32>
    %cst = arith.constant dense<0.000000e+00> : vector<16x64xf32>
    %2 = tpu.matmul %0, %1, %cst {dimension_numbers = #tpu.dot_dimension_numbers<[1], [0], [0], [1], [0, 0, 1, 1], [], []>} : vector<16x32xf32>, vector<32x64xf32>, vector<16x64xf32> -> vector<16x64xf32>
    %c0_3 = arith.constant 0 : index
    %c0_4 = arith.constant 0 : index
    %3 = vector.load %arg3[%c0_3, %c0_4] : memref<1x64xf32, #tpu.memory_space<vmem>>, vector<1x64xf32>
    %4 = vector.broadcast %3 : vector<1x64xf32> to vector<16x64xf32>
    %5 = arith.addf %2, %4 : vector<16x64xf32>
    %c0_5 = arith.constant 0 : index
    %c0_6 = arith.constant 0 : index
    %6 = vector.load %arg4[%c0_5, %c0_6] : memref<16x64xf32, #tpu.memory_space<vmem>>, vector<16x64xf32>
    tpu.vector_store %arg4[%c0_5, %c0_6], %5 {strides = array<i32>} : memref<16x64xf32, #tpu.memory_space<vmem>>, vector<16x64xf32>,
    return
  }
  func.func @transform_0(%arg0: i32) -> (i32, i32) {
    %c0_i32 = arith.constant 0 : i32
    %c0_i32_0 = arith.constant 0 : i32
    %c0_i32_1 = arith.constant 0 : i32
    return %c0_i32, %c0_i32_0 : i32, i32
  }
  func.func @transform_1(%arg0: i32) -> (i32, i32) {
    %c0_i32 = arith.constant 0 : i32
    %c0_i32_0 = arith.constant 0 : i32
    return %c0_i32, %arg0 : i32, i32
  }
  func.func @transform_2(%arg0: i32) -> (i32, i32) {
    %c0_i32 = arith.constant 0 : i32
    %c0_i32_0 = arith.constant 0 : i32
    return %c0_i32, %arg0 : i32, i32
  }
  func.func @transform_3(%arg0: i32) -> (i32, i32) {
    %c0_i32 = arith.constant 0 : i32
    %c0_i32_0 = arith.constant 0 : i32
    return %c0_i32, %arg0 : i32, i32
  }
}

</mosaic_0001>

<llo_original>
// kernel: spatialvla_multimodal_projector.1
$region0: #{spatialvla_multimodal_projector.1}
  #allocation0 [shape = 'u32[]', space=smem, size = 0x4, offset = 0x4, fixed_abs, tag = 'smem constant byte address 0x4 - core index']
  #allocation1 [shape = 'u32[72,128]{1,0:T(1,128)}', space=vmem, size = 0x9000, scoped, tag = 'internal scratch']
  %s0 = inlined_call_operand.hbm [shape: f32[16,32], index: 0, kind: input, shape index: {}]
  %s1 = inlined_call_operand.hbm [shape: f32[32,64], index: 1, kind: input, shape index: {}]
  %s2 = inlined_call_operand.vmem [shape: f32[1,64], index: 2, kind: input, shape index: {}]
  %s3 = inlined_call_operand.hbm [shape: f32[16,64], index: 3, kind: output, shape index: {}]
  %s4 = sld [smem:[#allocation0]]
  $region30: #{spatialvla_multimodal_projector.1} parent=0
    _
  %s6 = ssub.s32 1, %s4
  %s7 = scalar_select 0, %s6, %s4
  $region1: #{spatialvla_multimodal_projector.1} parent=0
    #allocation2 [shape = 'u8[8192]{0}', space=vmem, size = 0x2000, scoped, tag = 'input window, operand 0, single buffered']
    #allocation3 [shape = 's32[1]{0}', space=sflag, size = 0x4, scoped, tag = 'scoped memory for spatialvla_multimodal_projector.1']
    #allocation4 [shape = 's32[1]{0}', space=sflag, size = 0x4, scoped, tag = 'scoped memory for spatialvla_multimodal_projector.1']
    #allocation5 [shape = 'u8[16384]{0}', space=vmem, size = 0x4000, scoped, tag = 'input window, operand 1, single buffered']
    #allocation6 [shape = 's32[1]{0}', space=sflag, size = 0x4, scoped, tag = 'scoped memory for spatialvla_multimodal_projector.1']
    #allocation7 [shape = 'u8[8192]{0}', space=vmem, size = 0x2000, scoped, tag = 'output window, operand 0, single buffered']
    %8 = vsyncpa [#allocation3], 0
    %9 = vsyncpa [#allocation6], 0
    %10 = vsyncpa [#allocation4], 0
    // Predicated region
    $region2: #{spatialvla_multimodal_projector.1} parent=1 // pred_check
      _
    $region3: #{spatialvla_multimodal_projector.1} parent=1 // pred_check_branch
      %12 = sbr.rel (0) target = $region5
    $region4: #{spatialvla_multimodal_projector.1} parent=1 // pred_region
      %14 = vsyncadd [#allocation3], 0
      %s15 = sshll.u32 %s0, 4
      %s16 = int_to_ptr.hbm [resolvable:$true] %s15
      %s17 = sshll.u32 [#allocation2], 4
      %s18 = int_to_ptr.vmem [resolvable:$true] %s17
      %23 = dma.hbm_to_vmem [thread:$0]  %s16, 256, %s18, [#allocation3], 128, 128, 8
    $region5: #{spatialvla_multimodal_projector.1} parent=1 // pred_fallthru
      _
    // Predicated region
    $region6: #{spatialvla_multimodal_projector.1} parent=1 // pred_check
      _
    $region7: #{spatialvla_multimodal_projector.1} parent=1 // pred_check_branch
      %25 = sbr.rel (0) target = $region9
    $region8: #{spatialvla_multimodal_projector.1} parent=1 // pred_region
      %27 = vsyncadd [#allocation6], 0
      %s28 = sshll.u32 %s1, 4
      %s29 = int_to_ptr.hbm [resolvable:$true] %s28
      %s30 = sshll.u32 [#allocation5], 4
      %s31 = int_to_ptr.vmem [resolvable:$true] %s30
      %36 = dma.hbm_to_vmem [thread:$0]  %s29, 512, %s31, [#allocation6], 128, 128, 8
    $region9: #{spatialvla_multimodal_projector.1} parent=1 // pred_fallthru
      _
    // Predicated region
    $region10: #{spatialvla_multimodal_projector.1} parent=1 // pred_check
      _
    $region11: #{spatialvla_multimodal_projector.1} parent=1 // pred_check_branch
      %38 = sbr.rel (0) target = $region13
    $region12: #{spatialvla_multimodal_projector.1} parent=1 // pred_region
      _
    $region13: #{spatialvla_multimodal_projector.1} parent=1 // pred_fallthru
      _
    // Predicated region
    $region14: #{spatialvla_multimodal_projector.1} parent=1 // pred_check
      _
    $region15: #{spatialvla_multimodal_projector.1} parent=1 // pred_check_branch
      %40 = sbr.rel (0) target = $region17
    $region16: #{spatialvla_multimodal_projector.1} parent=1 // pred_region
      %42 = dma.done [#allocation3], 256
    $region17: #{spatialvla_multimodal_projector.1} parent=1 // pred_fallthru
      _
    // Predicated region
    $region18: #{spatialvla_multimodal_projector.1} parent=1 // pred_check
      _
    $region19: #{spatialvla_multimodal_projector.1} parent=1 // pred_check_branch
      %44 = sbr.rel (0) target = $region21
    $region20: #{spatialvla_multimodal_projector.1} parent=1 // pred_region
      %46 = dma.done [#allocation6], 512
    $region21: #{spatialvla_multimodal_projector.1} parent=1 // pred_fallthru
      _
    %v47 = vld [vmem:[#allocation2] sm:$0xff]
    %v48 = vld [vmem:[#allocation2 + $0x8] sm:$0xff]
    %v49 = vld [vmem:[#allocation5] sm:$0xff]
    %v50 = vld [vmem:[#allocation5 + $0x8] sm:$0xff]
    %v51 = vld [vmem:[#allocation5 + $0x10] sm:$0xff]
    %v52 = vld [vmem:[#allocation5 + $0x18] sm:$0xff]
    %v53 = vld [vmem:[%s2] sm:$0x1]
    %v55 = vperm.slane %v53, 0
    %vm57 = vcmask 261120
    %v59 = vsel %vm57, %v47, 0
    %v62 = vsel %vm57, %v48, 0
    %64 = vmatpush.msra.mxu0 0.0
    %65 = vmatpush.msra.mxu0 0.0
    %66 = vmatpush.msra.mxu0 0.0
    %67 = vmatpush.msra.mxu0 0.0
    %68 = vmatpush.msra.mxu0 0.0
    %69 = vmatpush.msra.mxu0 0.0
    %70 = vmatpush.msra.mxu0 0.0
    %71 = vmatpush.msra.mxu0 0.0
    %72 = vmatpush.msra.mxu0 0.0
    %73 = vmatpush.msra.mxu0 0.0
    %74 = vmatpush.msra.mxu0 0.0
    %75 = vmatpush.msra.mxu0 0.0
    %76 = vmatpush.msra.mxu0 %v52
    %77 = vmatpush.msra.mxu0 %v51
    %78 = vmatpush.msra.mxu0 %v50
    %79 = vmatpush.msra.mxu0 %v49
    %80 = vmatmul.f32.gmra.mxu0 %v59
    %v81 = vpop.f32.mrf.mxu0
    %v82 = vadd.f32 %v55, %v81
    %83 = vmatmul.f32.gmra.mxu0 %v62
    %v84 = vpop.f32.mrf.mxu0
    %v85 = vadd.f32 %v55, %v84
    %86 = vdwg.mxu0
    %vm87 = vcmask 523264
    %88 = vst.msk [vmem:[#allocation7] sm:$0xff] %vm87, %v82
    %89 = vst.msk [vmem:[#allocation7 + $0x8] sm:$0xff] %vm87, %v85
    // Predicated region
    $region22: #{spatialvla_multimodal_projector.1} parent=1 // pred_check
      _
    $region23: #{spatialvla_multimodal_projector.1} parent=1 // pred_check_branch
      %91 = sbr.rel (0) target = $region25
    $region24: #{spatialvla_multimodal_projector.1} parent=1 // pred_region
      %93 = vsyncadd [#allocation4], 0
      %s94 = sshll.u32 [#allocation7], 4
      %s95 = int_to_ptr.vmem [resolvable:$true] %s94
      %s96 = sshll.u32 %s3, 4
      %s97 = int_to_ptr.hbm [resolvable:$true] %s96
      %102 = dma.vmem_to_hbm [thread:$0]  %s95, 256, %s97, [#allocation4], 128, 128, 8
    $region25: #{spatialvla_multimodal_projector.1} parent=1 // pred_fallthru
      _
    // Predicated region
    $region26: #{spatialvla_multimodal_projector.1} parent=1 // pred_check
      _
    $region27: #{spatialvla_multimodal_projector.1} parent=1 // pred_check_branch
      %104 = sbr.rel (0) target = $region29
    $region28: #{spatialvla_multimodal_projector.1} parent=1 // pred_region
      %106 = dma.done [#allocation4], 256
    $region29: #{spatialvla_multimodal_projector.1} parent=1 // pred_fallthru
      _
    %107 = vsyncpa [#allocation3], 1
    %108 = vsyncpa [#allocation6], 1
    %109 = vsyncpa [#allocation4], 1

</llo_original>
